<compile_context>
chip_gen: v6e
topology: v6e:2x2x1
jax: 0.10.0
libtpu: 0.0.40
codegen_flags: <defaults>
</compile_context>

<pallas_src>
import jax
import jax.numpy as jnp
from jax.experimental import pallas as pl
from jax.experimental.pallas import tpu as pltpu

CIFAR_MEAN = [0.4914, 0.4822, 0.4465]
CIFAR_STD = [0.247, 0.2435, 0.2616]


def get_cifar_params(resol):
    """JAX equivalent of the torch helper: (1, 3, resol, resol) mean/std maps."""
    mean = jnp.stack(
        [jnp.full((resol, resol), m, dtype=jnp.float32) for m in CIFAR_MEAN]
    )[None]
    std = jnp.stack(
        [jnp.full((resol, resol), s, dtype=jnp.float32) for s in CIFAR_STD]
    )[None]
    return mean, std


def _normalize_kernel(x_ref, mean_ref, inv_std_ref, o_ref):
    # (bn, 3*H*W) tile, (1, 3*H*W) resident constants; sublane broadcast is
    # cheap on the VPU.  Single fused subtract + multiply, nothing else.
    o_ref[...] = (x_ref[...] - mean_ref[...]) * inv_std_ref[...]


def _pick_block_rows(rows, bytes_per_row, target_tile_bytes, min_steps):
    """Choose the block height (number of batch rows per grid step)."""
    total_bytes = rows * bytes_per_row
    # Tiny inputs: a single full-array block (full-dims exemption from the
    # (8,128) rule); splitting would only add per-step overhead.
    if rows <= 8 or total_bytes <= min(256 * 1024, target_tile_bytes):
        return rows

    # Largest multiple-of-8 row count that fits the per-tile byte budget.
    max_rows = max(8, (target_tile_bytes // bytes_per_row) // 8 * 8)
    # Cap so the grid has >= min_steps steps (megacore sharding on v7x plus
    # DMA/compute pipeline overlap).
    cap = max(8, (rows // min_steps) // 8 * 8)
    bn = min(max_rows, cap)

    # Prefer a bn that divides rows exactly (no padded partial last block),
    # as long as it does not shrink the tile by more than 2x.
    for d in range(bn, 7, -8):
        if rows % d == 0:
            if 2 * d >= bn:
                bn = d
            break
    return bn


def cifar_normalize(
    x,
    *,
    target_tile_bytes=6 * 1024 * 1024,
    min_steps=4,
    vmem_limit_bytes=40 << 20,
):
    """out = (x - CIFAR_MEAN[c]) / CIFAR_STD[c].  x: (N, 3, R, R) float32."""
    N, C, H, W = x.shape
    assert C == 3, "CIFAR normalize expects 3 channels"
    hw = H * W
    chw = C * hw

    # Lane-dense 2D view: one batch element per row, channels laid out
    # contiguously along lanes (c*hw ... (c+1)*hw - 1).
    x2 = x.reshape(N, chw)

    # Per-lane constant rows, built once in the wrapper (plain XLA ops).
    mean_row = jnp.repeat(jnp.asarray(CIFAR_MEAN, dtype=jnp.float32), hw)[None, :]
    inv_std_row = jnp.repeat(
        1.0 / jnp.asarray(CIFAR_STD, dtype=jnp.float32), hw
    )[None, :]

    bn = _pick_block_rows(N, chw * 4, target_tile_bytes, min_steps)
    grid = (pl.cdiv(N, bn),)

    out2 = pl.pallas_call(
        _normalize_kernel,
        out_shape=jax.ShapeDtypeStruct((N, chw), x.dtype),
        grid=grid,
        in_specs=[
            pl.BlockSpec((bn, chw), lambda i: (i, 0)),
            pl.BlockSpec((1, chw), lambda i: (0, 0)),   # resident constants
            pl.BlockSpec((1, chw), lambda i: (0, 0)),   # resident constants
        ],
        out_specs=pl.BlockSpec((bn, chw), lambda i: (i, 0)),
        compiler_params=pltpu.CompilerParams(
            dimension_semantics=("parallel",),
            vmem_limit_bytes=vmem_limit_bytes,
        ),
    )(x2, mean_row, inv_std_row)
    return out2.reshape(N, C, H, W)


if __name__ == "__main__":
    resol = 16

    # Small sanity check (single full-array block).
    x = jax.random.uniform(
        jax.random.PRNGKey(0), (2, 3, resol, resol), dtype=jnp.float32
    )
    out = jax.block_until_ready(cifar_normalize(x))

    mean, std = get_cifar_params(resol)
    ref = (x - mean) / std
    assert out.shape == x.shape and out.dtype == x.dtype
    assert jnp.allclose(out, ref, atol=1e-5, rtol=1e-5)

    # Multi-block path (exact tiling, >= 2 grid steps) with a tiny tile budget.
    x_big = jax.random.uniform(
        jax.random.PRNGKey(1), (64, 3, resol, resol), dtype=jnp.float32
    )
    out_big = jax.block_until_ready(
        cifar_normalize(x_big, target_tile_bytes=24 * 1024)
    )
    ref_big = (x_big - mean) / std
    assert jnp.allclose(out_big, ref_big, atol=1e-5, rtol=1e-5)

    # Partial-last-block path (rows not a multiple of the block height).
    x_odd = jax.random.uniform(
        jax.random.PRNGKey(2), (10, 3, resol, resol), dtype=jnp.float32
    )
    out_odd = jax.block_until_ready(
        cifar_normalize(x_odd, target_tile_bytes=24 * 1024)
    )
    ref_odd = (x_odd - mean) / std
    assert jnp.allclose(out_odd, ref_odd, atol=1e-5, rtol=1e-5)

    print("KERNEL_OK")
</pallas_src>

<mosaic_0001>
module attributes {stable_mosaic.version = 11 : i64} {
  func.func @_normalize_kernel(%arg0: i32, %arg1: memref<2x768xf32, #tpu.memory_space<vmem>>, %arg2: memref<1x768xf32, #tpu.memory_space<vmem>>, %arg3: memref<1x768xf32, #tpu.memory_space<vmem>>, %arg4: memref<2x768xf32, #tpu.memory_space<vmem>>) attributes {dimension_semantics = [#tpu.dimension_semantics<parallel>], iteration_bounds = array<i64: 1>, scalar_prefetch = 0 : i64, scratch_operands = 0 : i64, tpu.core_type = #tpu.core_type<tc>, window_params = [{transform_indices = @transform_0, window_bounds = array<i64: 2, 768>}, {pipeline_mode = #tpu.pipeline_mode<synchronous>, transform_indices = @transform_1, window_bounds = array<i64: 1, 768>}, {pipeline_mode = #tpu.pipeline_mode<synchronous>, transform_indices = @transform_2, window_bounds = array<i64: 1, 768>}, {transform_indices = @transform_3, window_bounds = array<i64: 2, 768>}]} {
    %c0 = arith.constant 0 : index
    %c0_0 = arith.constant 0 : index
    %0 = vector.load %arg1[%c0, %c0_0] : memref<2x768xf32, #tpu.memory_space<vmem>>, vector<2x768xf32>
    %c0_1 = arith.constant 0 : index
    %c0_2 = arith.constant 0 : index
    %1 = vector.load %arg2[%c0_1, %c0_2] : memref<1x768xf32, #tpu.memory_space<vmem>>, vector<1x768xf32>
    %2 = vector.broadcast %1 : vector<1x768xf32> to vector<2x768xf32>
    %3 = arith.subf %0, %2 : vector<2x768xf32>
    %c0_3 = arith.constant 0 : index
    %c0_4 = arith.constant 0 : index
    %4 = vector.load %arg3[%c0_3, %c0_4] : memref<1x768xf32, #tpu.memory_space<vmem>>, vector<1x768xf32>
    %5 = vector.broadcast %4 : vector<1x768xf32> to vector<2x768xf32>
    %6 = arith.mulf %3, %5 : vector<2x768xf32>
    %c0_5 = arith.constant 0 : index
    %c0_6 = arith.constant 0 : index
    %7 = vector.load %arg4[%c0_5, %c0_6] : memref<2x768xf32, #tpu.memory_space<vmem>>, vector<2x768xf32>
    tpu.vector_store %arg4[%c0_5, %c0_6], %6 {strides = array<i32>} : memref<2x768xf32, #tpu.memory_space<vmem>>, vector<2x768xf32>,
    return
  }
  func.func @transform_0(%arg0: i32) -> (i32, i32) {
    %c0_i32 = arith.constant 0 : i32
    %c0_i32_0 = arith.constant 0 : i32
    return %arg0, %c0_i32 : i32, i32
  }
  func.func @transform_1(%arg0: i32) -> (i32, i32) {
    %c0_i32 = arith.constant 0 : i32
    %c0_i32_0 = arith.constant 0 : i32
    %c0_i32_1 = arith.constant 0 : i32
    return %c0_i32, %c0_i32_0 : i32, i32
  }
  func.func @transform_2(%arg0: i32) -> (i32, i32) {
    %c0_i32 = arith.constant 0 : i32
    %c0_i32_0 = arith.constant 0 : i32
    %c0_i32_1 = arith.constant 0 : i32
    return %c0_i32, %c0_i32_0 : i32, i32
  }
  func.func @transform_3(%arg0: i32) -> (i32, i32) {
    %c0_i32 = arith.constant 0 : i32
    %c0_i32_0 = arith.constant 0 : i32
    return %arg0, %c0_i32 : i32, i32
  }
}

</mosaic_0001>

<llo_original>
// kernel: tpu_custom_call.1
$region0: #{tpu_custom_call.1}
  #allocation0 [shape = 'u32[]', space=smem, size = 0x4, offset = 0x4, fixed_abs, tag = 'smem constant byte address 0x4 - core index']
  #allocation1 [shape = 'u32[144,128]{1,0:T(1,128)}', space=vmem, size = 0x12000, scoped, tag = 'internal scratch']
  %s0 = inlined_call_operand.hbm [shape: f32[2,768], index: 0, kind: input, shape index: {}]
  %s1 = inlined_call_operand.hbm [shape: f32[1,768], index: 1, kind: input, shape index: {}]
  %s2 = inlined_call_operand.hbm [shape: f32[1,768], index: 2, kind: input, shape index: {}]
  %s3 = inlined_call_operand.hbm [shape: f32[2,768], index: 3, kind: output, shape index: {}]
  %s4 = sld [smem:[#allocation0]]
  $region34: #{tpu_custom_call.1} parent=0
    _
  %s6 = ssub.s32 1, %s4
  %s7 = scalar_select 0, %s6, %s4
  $region1: #{tpu_custom_call.1} parent=0
    #allocation2 [shape = 'u8[6144]{0}', space=vmem, size = 0x1800, scoped, tag = 'input window, operand 0, single buffered']
    #allocation3 [shape = 's32[1]{0}', space=sflag, size = 0x4, scoped, tag = 'scoped memory for tpu_custom_call.1']
    #allocation4 [shape = 's32[1]{0}', space=sflag, size = 0x4, scoped, tag = 'scoped memory for tpu_custom_call.1']
    #allocation5 [shape = 'u8[3072]{0}', space=vmem, size = 0xc00, scoped, tag = 'input window, operand 1, single buffered']
    #allocation6 [shape = 's32[1]{0}', space=sflag, size = 0x4, scoped, tag = 'scoped memory for tpu_custom_call.1']
    #allocation7 [shape = 'u8[3072]{0}', space=vmem, size = 0xc00, scoped, tag = 'input window, operand 2, single buffered']
    #allocation8 [shape = 'u8[6144]{0}', space=vmem, size = 0x1800, scoped, tag = 'output window, operand 0, single buffered']
    %8 = vsyncpa [#allocation3], 0
    %9 = vsyncpa [#allocation6], 0
    %10 = vsyncpa [#allocation4], 0
    // Predicated region
    $region2: #{tpu_custom_call.1} parent=1 // pred_check
      _
    $region3: #{tpu_custom_call.1} parent=1 // pred_check_branch
      %12 = sbr.rel (0) target = $region5
    $region4: #{tpu_custom_call.1} parent=1 // pred_region
      %s14 = ssub.s32 192, 192
      %15 = vsyncadd [#allocation3], %s14
      %s17 = sshll.u32 [#allocation2], 4
      %s18 = int_to_ptr.vmem [resolvable:$true] %s17
      %20 = dma.hbm_to_vmem [thread:$0]  %s0, 192, %s18, [#allocation3]
    $region5: #{tpu_custom_call.1} parent=1 // pred_fallthru
      _
    // Predicated region
    $region6: #{tpu_custom_call.1} parent=1 // pred_check
      _
    $region7: #{tpu_custom_call.1} parent=1 // pred_check_branch
      %22 = sbr.rel (0) target = $region9
    $region8: #{tpu_custom_call.1} parent=1 // pred_region
      %s24 = ssub.s32 96, 96
      %25 = vsyncadd [#allocation6], %s24
      %s27 = sshll.u32 [#allocation5], 4
      %s28 = int_to_ptr.vmem [resolvable:$true] %s27
      %30 = dma.hbm_to_vmem [thread:$0]  %s1, 96, %s28, [#allocation6]
    $region9: #{tpu_custom_call.1} parent=1 // pred_fallthru
      _
    // Predicated region
    $region10: #{tpu_custom_call.1} parent=1 // pred_check
      _
    $region11: #{tpu_custom_call.1} parent=1 // pred_check_branch
      %32 = sbr.rel (0) target = $region13
    $region12: #{tpu_custom_call.1} parent=1 // pred_region
      %s34 = ssub.s32 96, 96
      %35 = vsyncadd [#allocation6], %s34
      %s37 = sshll.u32 [#allocation7], 4
      %s38 = int_to_ptr.vmem [resolvable:$true] %s37
      %40 = dma.hbm_to_vmem [thread:$0]  %s2, 96, %s38, [#allocation6]
    $region13: #{tpu_custom_call.1} parent=1 // pred_fallthru
      _
    // Predicated region
    $region14: #{tpu_custom_call.1} parent=1 // pred_check
      _
    $region15: #{tpu_custom_call.1} parent=1 // pred_check_branch
      %42 = sbr.rel (0) target = $region17
    $region16: #{tpu_custom_call.1} parent=1 // pred_region
      %43 = dma.done [#allocation3], 192
    $region17: #{tpu_custom_call.1} parent=1 // pred_fallthru
      _
    // Predicated region
    $region18: #{tpu_custom_call.1} parent=1 // pred_check
      _
    $region19: #{tpu_custom_call.1} parent=1 // pred_check_branch
      %45 = sbr.rel (0) target = $region21
    $region20: #{tpu_custom_call.1} parent=1 // pred_region
      %46 = dma.done [#allocation6], 96
    $region21: #{tpu_custom_call.1} parent=1 // pred_fallthru
      _
    // Predicated region
    $region22: #{tpu_custom_call.1} parent=1 // pred_check
      _
    $region23: #{tpu_custom_call.1} parent=1 // pred_check_branch
      %48 = sbr.rel (0) target = $region25
    $region24: #{tpu_custom_call.1} parent=1 // pred_region
      %49 = dma.done [#allocation6], 96
    $region25: #{tpu_custom_call.1} parent=1 // pred_fallthru
      _
    %v50 = vld [vmem:[#allocation2] sm:$0xff]
    %v51 = vld [vmem:[#allocation2 + $0x8] sm:$0xf]
    %v52 = vld [vmem:[#allocation5] sm:$0x3f]
    %v54 = vlaneseq
    %v55 = vshrl.u32 %v54, 7
    %v56 = vsub.s32 0, %v55
    %v57 = vrot.slane %v52, %v56
    %v58 = vlaneseq
    %v59 = vshrl.u32 %v58, 7
    %v60 = vsub.s32 1, %v59
    %v61 = vrot.slane %v52, %v60
    %v62 = vlaneseq
    %v63 = vshrl.u32 %v62, 7
    %v64 = vsub.s32 2, %v63
    %v65 = vrot.slane %v52, %v64
    %v66 = vlaneseq
    %v67 = vshrl.u32 %v66, 7
    %v68 = vsub.s32 3, %v67
    %v69 = vrot.slane %v52, %v68
    %v70 = vlaneseq
    %v71 = vshrl.u32 %v70, 7
    %v72 = vsub.s32 4, %v71
    %v73 = vrot.slane %v52, %v72
    %v74 = vlaneseq
    %v75 = vshrl.u32 %v74, 7
    %v76 = vsub.s32 5, %v75
    %v77 = vrot.slane %v52, %v76
    %v78 = vcombine.low %v57, %v61
    %v79 = vcombine.low %v65, %v69
    %v81 = vunpack.c.l.s4 1983009808
    %v82 = vunpack.c.0.s8 %v81
    %v83 = vlaneseq
    %v84 = vshrl.u32 %v83, 7
    %v85 = vsub.s32 %v82, %v84
    %v86 = vrot.slane %v78, %v85
    %v88 = vunpack.c.l.s4 1983009808
    %v89 = vunpack.c.0.s8 %v88
    %v90 = vlaneseq
    %v91 = vshrl.u32 %v90, 7
    %v92 = vsub.s32 %v89, %v91
    %v93 = vrot.slane %v79, %v92
    %v94 = vcombine.low %v86, %v93
    %v95 = vcombine.low %v73, %v77
    %v97 = vunpack.c.l.s4 1983009808
    %v98 = vunpack.c.0.s8 %v97
    %v99 = vlaneseq
    %v100 = vshrl.u32 %v99, 7
    %v101 = vsub.s32 %v98, %v100
    %v102 = vrot.slane %v95, %v101
    %v105 = vsub.f32 %v50, %v94
    %v106 = vsub.f32 %v51, %v102
    %v107 = vld [vmem:[#allocation7] sm:$0x3f]
    %v109 = vlaneseq
    %v110 = vshrl.u32 %v109, 7
    %v111 = vsub.s32 0, %v110
    %v112 = vrot.slane %v107, %v111
    %v113 = vlaneseq
    %v114 = vshrl.u32 %v113, 7
    %v115 = vsub.s32 1, %v114
    %v116 = vrot.slane %v107, %v115
    %v117 = vlaneseq
    %v118 = vshrl.u32 %v117, 7
    %v119 = vsub.s32 2, %v118
    %v120 = vrot.slane %v107, %v119
    %v121 = vlaneseq
    %v122 = vshrl.u32 %v121, 7
    %v123 = vsub.s32 3, %v122
    %v124 = vrot.slane %v107, %v123
    %v125 = vlaneseq
    %v126 = vshrl.u32 %v125, 7
    %v127 = vsub.s32 4, %v126
    %v128 = vrot.slane %v107, %v127
    %v129 = vlaneseq
    %v130 = vshrl.u32 %v129, 7
    %v131 = vsub.s32 5, %v130
    %v132 = vrot.slane %v107, %v131
    %v133 = vcombine.low %v112, %v116
    %v134 = vcombine.low %v120, %v124
    %v136 = vunpack.c.l.s4 1983009808
    %v137 = vunpack.c.0.s8 %v136
    %v138 = vlaneseq
    %v139 = vshrl.u32 %v138, 7
    %v140 = vsub.s32 %v137, %v139
    %v141 = vrot.slane %v133, %v140
    %v143 = vunpack.c.l.s4 1983009808
    %v144 = vunpack.c.0.s8 %v143
    %v145 = vlaneseq
    %v146 = vshrl.u32 %v145, 7
    %v147 = vsub.s32 %v144, %v146
    %v148 = vrot.slane %v134, %v147
    %v149 = vcombine.low %v141, %v148
    %v150 = vcombine.low %v128, %v132
    %v152 = vunpack.c.l.s4 1983009808
    %v153 = vunpack.c.0.s8 %v152
    %v154 = vlaneseq
    %v155 = vshrl.u32 %v154, 7
    %v156 = vsub.s32 %v153, %v155
    %v157 = vrot.slane %v150, %v156
    %v160 = vmul.f32 %v105, %v149
    %v161 = vmul.f32 %v106, %v157
    %162 = vst [vmem:[#allocation8] sm:$0xff] %v160
    %163 = vst [vmem:[#allocation8 + $0x8] sm:$0xf] %v161
    // Predicated region
    $region26: #{tpu_custom_call.1} parent=1 // pred_check
      _
    $region27: #{tpu_custom_call.1} parent=1 // pred_check_branch
      %165 = sbr.rel (0) target = $region29
    $region28: #{tpu_custom_call.1} parent=1 // pred_region
      %s167 = ssub.s32 192, 192
      %168 = vsyncadd [#allocation4], %s167
      %s170 = sshll.u32 [#allocation8], 4
      %s171 = int_to_ptr.vmem [resolvable:$true] %s170
      %173 = dma.vmem_to_hbm [thread:$0]  %s171, 192, %s3, [#allocation4]
    $region29: #{tpu_custom_call.1} parent=1 // pred_fallthru
      _
    // Predicated region
    $region30: #{tpu_custom_call.1} parent=1 // pred_check
      _
    $region31: #{tpu_custom_call.1} parent=1 // pred_check_branch
      %175 = sbr.rel (0) target = $region33
    $region32: #{tpu_custom_call.1} parent=1 // pred_region
      %176 = dma.done [#allocation4], 192
    $region33: #{tpu_custom_call.1} parent=1 // pred_fallthru
      _
    %177 = vsyncpa [#allocation3], 1
    %178 = vsyncpa [#allocation6], 1
    %179 = vsyncpa [#allocation4], 1

</llo_original>
